<compile_context>
chip_gen: v7x
topology: tpu7x:2x2x1
jax: 0.10.0
libtpu: 0.0.40
codegen_flags: <defaults>
</compile_context>

<pallas_src>
import jax
import jax.numpy as jnp
from jax.experimental import pallas as pl
from jax.experimental.pallas import tpu as pltpu

BN_EPS = 1e-5
NEG_BIG = -1e30          # bias for padded class lanes -> exp() == 0 in softmax
LANE = 128
SUBLANE = 8
MAX_TILE_B = 2048        # upper bound on batch tile rows
TILE_VMEM_BUDGET = 32 * 1024 * 1024   # per-tile VMEM budget (safe on v5e/v6e/v7x)


def _round_up(n, m):
    return ((n + m - 1) // m) * m


# ----------------------------------------------------------------------------
# Kernel: one batch tile through the fused 3-layer MLP + softmax.
# ----------------------------------------------------------------------------
def mlp_kernel(x_ref, w1_ref, b1_ref, w2_ref, b2_ref, w3_ref, b3_ref, out_ref):
    # x arrives as f32 from HBM; cast to bf16 here (VPU, hidden under the DMA).
    x = x_ref[...].astype(jnp.bfloat16)

    # Layer 1: Linear + ReLU (BN1 folded into W2/b2 at prepare time).
    h1 = jnp.dot(x, w1_ref[...], preferred_element_type=jnp.float32) + b1_ref[...]
    h1 = jnp.maximum(h1, 0.0).astype(jnp.bfloat16)

    # Layer 2: Linear + ReLU (BN2 folded into W3/b3 at prepare time).
    h2 = jnp.dot(h1, w2_ref[...], preferred_element_type=jnp.float32) + b2_ref[...]
    h2 = jnp.maximum(h2, 0.0).astype(jnp.bfloat16)

    # Layer 3: Linear -> logits (padded class lanes carry a -1e30 bias).
    logits = jnp.dot(h2, w3_ref[...], preferred_element_type=jnp.float32) + b3_ref[...]

    # Softmax over the lane-dense padded class axis (exact divide: the approx
    # reciprocal was not accurate enough for row-sum == 1).
    m = jnp.max(logits, axis=1, keepdims=True)
    e = jnp.exp(logits - m)
    denom = jnp.sum(e, axis=1, keepdims=True)
    out_ref[...] = (e / denom).astype(out_ref.dtype)


# ----------------------------------------------------------------------------
# One-time parameter preparation (run at model-load time, NOT per call):
# fold eval-mode BN into the following Linear, pad feature dims to 128 lanes,
# cast weights to bf16 (MXU-native), keep biases f32.
# ----------------------------------------------------------------------------
def prepare_params(params):
    w1, b1 = params["w1"], params["b1"]
    w2, b2 = params["w2"], params["b2"]
    w3, b3 = params["w3"], params["b3"]

    # BN1 fold into Linear2:  bn1(h) = h*s1 + t1  =>  W2' = s1^T * W2, b2' = b2 + t1 @ W2
    s1 = params["g1"] * jax.lax.rsqrt(params["v1"] + BN_EPS)       # [1, H]
    t1 = params["be1"] - params["m1"] * s1                          # [1, H]
    w2f = s1.reshape(-1, 1) * w2
    b2f = b2 + t1 @ w2

    # BN2 fold into Linear3.
    s2 = params["g2"] * jax.lax.rsqrt(params["v2"] + BN_EPS)        # [1, H2]
    t2 = params["be2"] - params["m2"] * s2
    w3f = s2.reshape(-1, 1) * w3
    b3f = b3 + t2 @ w3

    D, H = w1.shape
    H2 = w2.shape[1]
    C = w3.shape[1]
    Dp, Hp, H2p, Cp = (_round_up(d, LANE) for d in (D, H, H2, C))

    def pad_w(w, rp, cp):
        return jnp.pad(w, ((0, rp - w.shape[0]), (0, cp - w.shape[1]))).astype(jnp.bfloat16)

    def pad_b(b, cp, fill=0.0):
        return jnp.pad(b, ((0, 0), (0, cp - b.shape[1])),
                       constant_values=fill).astype(jnp.float32)

    fused = {
        "w1": pad_w(w1, Dp, Hp),   "b1": pad_b(b1, Hp),
        "w2": pad_w(w2f, Hp, H2p), "b2": pad_b(b2f, H2p),
        "w3": pad_w(w3f, H2p, Cp), "b3": pad_b(b3f, Cp, fill=NEG_BIG),
    }
    dims = (D, H, H2, C, Dp, Hp, H2p, Cp)
    return fused, dims


# ----------------------------------------------------------------------------
# Tiling / spec helpers.
# ----------------------------------------------------------------------------
def _choose_tile_b(B, Dp, Hp, H2p, Cp, resident_bytes):
    """Largest batch tile (multiple of 8, <= MAX_TILE_B) fitting the VMEM budget,
    split near-evenly so batch padding waste stays small."""
    # Per-row VMEM bytes in a tile: double-buffered f32 x + double-buffered
    # bf16 out + f32 intermediates (h1, h2, logits, exp).
    row_bytes = 2 * Dp * 4 + 2 * Cp * 2 + (Hp + H2p + 2 * Cp) * 4
    budget = TILE_VMEM_BUDGET - resident_bytes - (1 << 20)  # headroom
    max_tile = max(SUBLANE, min(MAX_TILE_B, (budget // row_bytes) // SUBLANE * SUBLANE))

    b_pad8 = _round_up(B, SUBLANE)
    if b_pad8 >= 1024:
        # Keep >= 2 grid steps (v7x megacore can split the "parallel" batch
        # axis) while every tile stays >= 512 rows (>= 256 keeps v6e/v7x's
        # 256-row MXU passes full in the M dimension).
        max_tile = min(max_tile, _round_up(-(-b_pad8 // 2), SUBLANE))

    if b_pad8 <= max_tile:
        return b_pad8
    num_tiles = -(-b_pad8 // max_tile)
    return _round_up(-(-b_pad8 // num_tiles), SUBLANE)


def _resident_spec(arr):
    """Constant-index (VMEM-resident) block; single-buffered to halve its
    VMEM footprint since it is never re-fetched."""
    shape = arr.shape
    index_map = lambda i: (0,) * len(shape)
    try:
        return pl.BlockSpec(shape, index_map, pipeline_mode=pl.Buffered(1))
    except (TypeError, AttributeError):   # older jax without pipeline_mode
        return pl.BlockSpec(shape, index_map)


# ----------------------------------------------------------------------------
# Forward: per-call work is (optional f32 zero-pad) + one pallas_call + slice.
# ----------------------------------------------------------------------------
def mlp_classifier_forward(x, fused, dims):
    """x: [B, D] float32. fused/dims: output of prepare_params (one-time).
    Returns {'out': [B, C] float32 softmax probabilities}."""
    B, D = x.shape
    D0, H, H2, C, Dp, Hp, H2p, Cp = dims
    assert D == D0

    resident_bytes = sum(int(a.size) * a.dtype.itemsize for a in fused.values())
    TILE_B = _choose_tile_b(B, Dp, Hp, H2p, Cp, resident_bytes)
    B_pad = _round_up(B, TILE_B)
    grid = (B_pad // TILE_B,)

    # Zero-pad only when needed (f32, no cast: the kernel casts to bf16).
    if B_pad != B or Dp != D:
        x = jnp.pad(x, ((0, B_pad - B), (0, Dp - D)))

    x_spec = pl.BlockSpec((TILE_B, Dp), lambda i: (i, 0))
    out_spec = pl.BlockSpec((TILE_B, Cp), lambda i: (i, 0))

    in_arrays = (x, fused["w1"], fused["b1"], fused["w2"], fused["b2"],
                 fused["w3"], fused["b3"])
    in_specs = [x_spec] + [_resident_spec(a) for a in in_arrays[1:]]

    tile_bytes = TILE_B * (2 * Dp * 4 + 2 * Cp * 2 + (Hp + H2p + 2 * Cp) * 4)
    vmem_limit = int(min(max(resident_bytes + tile_bytes + (2 << 20), 8 << 20), 48 << 20))

    cost = pl.CostEstimate(
        flops=2 * B_pad * (Dp * Hp + Hp * H2p + H2p * Cp),
        transcendentals=B_pad * Cp,
        bytes_accessed=B_pad * Dp * 4 + resident_bytes + B_pad * Cp * 2,
    )

    probs_pad = pl.pallas_call(
        mlp_kernel,
        out_shape=jax.ShapeDtypeStruct((B_pad, Cp), jnp.bfloat16),
        grid=grid,
        in_specs=in_specs,
        out_specs=out_spec,
        compiler_params=pltpu.CompilerParams(
            dimension_semantics=("parallel",),
            vmem_limit_bytes=vmem_limit,
        ),
        cost_estimate=cost,
    )(*in_arrays)

    return {"out": probs_pad[:B, :C].astype(jnp.float32)}


# ----------------------------------------------------------------------------
# Pure-JAX eval-mode reference (unfused, f32) for correctness checking.
# ----------------------------------------------------------------------------
def reference_forward(x, params):
    h = jnp.maximum(x @ params["w1"] + params["b1"], 0.0)
    h = (h - params["m1"]) * jax.lax.rsqrt(params["v1"] + BN_EPS) * params["g1"] + params["be1"]
    h = jnp.maximum(h @ params["w2"] + params["b2"], 0.0)
    h = (h - params["m2"]) * jax.lax.rsqrt(params["v2"] + BN_EPS) * params["g2"] + params["be2"]
    logits = h @ params["w3"] + params["b3"]
    return jax.nn.softmax(logits, axis=1)


# ----------------------------------------------------------------------------
# Deterministic synthetic parameters (Linear weights stored as [in, out]).
# ----------------------------------------------------------------------------
def init_params(key, input_dim, hidden_dim, num_classes):
    h2 = hidden_dim // 2
    keys = jax.random.split(key, 8)

    def lin(k, fan_in, fan_out):
        bound = 1.0 / jnp.sqrt(fan_in)
        kw, kb = jax.random.split(k)
        w = jax.random.uniform(kw, (fan_in, fan_out), jnp.float32, -bound, bound)
        b = jax.random.uniform(kb, (1, fan_out), jnp.float32, -bound, bound)
        return w, b

    w1, b1 = lin(keys[0], input_dim, hidden_dim)
    w2, b2 = lin(keys[1], hidden_dim, h2)
    w3, b3 = lin(keys[2], h2, num_classes)

    # BatchNorm1d params / running stats (eval mode).
    g1 = jnp.ones((1, hidden_dim), jnp.float32)
    be1 = jnp.zeros((1, hidden_dim), jnp.float32)
    m1 = 0.1 * jax.random.normal(keys[3], (1, hidden_dim), jnp.float32)
    v1 = 1.0 + 0.1 * jax.random.uniform(keys[4], (1, hidden_dim), jnp.float32)

    g2 = jnp.ones((1, h2), jnp.float32)
    be2 = jnp.zeros((1, h2), jnp.float32)
    m2 = 0.1 * jax.random.normal(keys[5], (1, h2), jnp.float32)
    v2 = 1.0 + 0.1 * jax.random.uniform(keys[6], (1, h2), jnp.float32)

    return {
        "w1": w1, "b1": b1, "g1": g1, "be1": be1, "m1": m1, "v1": v1,
        "w2": w2, "b2": b2, "g2": g2, "be2": be2, "m2": m2, "v2": v2,
        "w3": w3, "b3": b3,
    }


if __name__ == "__main__":
    B, INPUT_DIM, HIDDEN_DIM, NUM_CLASSES = 8, 32, 32, 8

    key = jax.random.PRNGKey(0)
    kx, kp = jax.random.split(key)
    x = jax.random.normal(kx, (B, INPUT_DIM), jnp.float32)
    params = init_params(kp, INPUT_DIM, HIDDEN_DIM, NUM_CLASSES)

    # One-time, model-load-time prep (BN fold + pad + bf16 cast).
    fused, dims = prepare_params(params)
    fused = jax.tree_util.tree_map(jax.block_until_ready, fused)

    fwd = jax.jit(lambda xb: mlp_classifier_forward(xb, fused, dims))
    out = fwd(x)
    probs = jax.block_until_ready(out["out"])

    ref = jax.block_until_ready(reference_forward(x, params))

    assert probs.shape == (B, NUM_CLASSES)
    assert bool(jnp.all(probs >= 0.0))
    # Exact divide in-kernel; remaining slack is the bf16 output rounding.
    assert bool(jnp.allclose(jnp.sum(probs, axis=1), 1.0, atol=2e-2))
    # bf16 weights / bf16 intermediates vs f32 reference.
    assert bool(jnp.allclose(probs, ref, atol=3e-2))
    print("KERNEL_OK")
</pallas_src>

<mosaic_0001>
module attributes {stable_mosaic.version = 11 : i64} {
  func.func @mlp_kernel(%arg0: i32, %arg1: memref<8x128xf32, #tpu.memory_space<vmem>>, %arg2: memref<128x128xbf16, #tpu.memory_space<vmem>>, %arg3: memref<1x128xf32, #tpu.memory_space<vmem>>, %arg4: memref<128x128xbf16, #tpu.memory_space<vmem>>, %arg5: memref<1x128xf32, #tpu.memory_space<vmem>>, %arg6: memref<128x128xbf16, #tpu.memory_space<vmem>>, %arg7: memref<1x128xf32, #tpu.memory_space<vmem>>, %arg8: memref<8x128xbf16, #tpu.memory_space<vmem>>) attributes {dimension_semantics = [#tpu.dimension_semantics<parallel>], iteration_bounds = array<i64: 1>, scalar_prefetch = 0 : i64, scratch_operands = 0 : i64, tpu.core_type = #tpu.core_type<tc>, window_params = [{transform_indices = @transform_0, window_bounds = array<i64: 8, 128>}, {pipeline_mode = #tpu.pipeline_mode<synchronous>, transform_indices = @transform_1, window_bounds = array<i64: 128, 128>}, {pipeline_mode = #tpu.pipeline_mode<synchronous>, transform_indices = @transform_2, window_bounds = array<i64: 1, 128>}, {pipeline_mode = #tpu.pipeline_mode<synchronous>, transform_indices = @transform_3, window_bounds = array<i64: 128, 128>}, {pipeline_mode = #tpu.pipeline_mode<synchronous>, transform_indices = @transform_4, window_bounds = array<i64: 1, 128>}, {pipeline_mode = #tpu.pipeline_mode<synchronous>, transform_indices = @transform_5, window_bounds = array<i64: 128, 128>}, {pipeline_mode = #tpu.pipeline_mode<synchronous>, transform_indices = @transform_6, window_bounds = array<i64: 1, 128>}, {transform_indices = @transform_7, window_bounds = array<i64: 8, 128>}]} {
    %c0 = arith.constant 0 : index
    %c0_0 = arith.constant 0 : index
    %0 = vector.load %arg1[%c0, %c0_0] : memref<8x128xf32, #tpu.memory_space<vmem>>, vector<8x128xf32>
    %1 = arith.truncf %0 : vector<8x128xf32> to vector<8x128xbf16>
    %c0_1 = arith.constant 0 : index
    %c0_2 = arith.constant 0 : index
    %2 = vector.load %arg2[%c0_1, %c0_2] : memref<128x128xbf16, #tpu.memory_space<vmem>>, vector<128x128xbf16>
    %cst = arith.constant dense<0.000000e+00> : vector<8x128xf32>
    %3 = tpu.matmul %1, %2, %cst {dimension_numbers = #tpu.dot_dimension_numbers<[1], [0], [0], [1], [0, 0, 1, 1], [], []>} : vector<8x128xbf16>, vector<128x128xbf16>, vector<8x128xf32> -> vector<8x128xf32>
    %c0_3 = arith.constant 0 : index
    %c0_4 = arith.constant 0 : index
    %4 = vector.load %arg3[%c0_3, %c0_4] : memref<1x128xf32, #tpu.memory_space<vmem>>, vector<1x128xf32>
    %5 = vector.broadcast %4 : vector<1x128xf32> to vector<8x128xf32>
    %6 = arith.addf %3, %5 : vector<8x128xf32>
    %cst_5 = arith.constant 0.000000e+00 : f32
    %7 = vector.broadcast %cst_5 : f32 to vector<8x128xf32>
    %8 = arith.maximumf %6, %7 : vector<8x128xf32>
    %9 = arith.truncf %8 : vector<8x128xf32> to vector<8x128xbf16>
    %c0_6 = arith.constant 0 : index
    %c0_7 = arith.constant 0 : index
    %10 = vector.load %arg4[%c0_6, %c0_7] : memref<128x128xbf16, #tpu.memory_space<vmem>>, vector<128x128xbf16>
    %cst_8 = arith.constant dense<0.000000e+00> : vector<8x128xf32>
    %11 = tpu.matmul %9, %10, %cst_8 {dimension_numbers = #tpu.dot_dimension_numbers<[1], [0], [0], [1], [0, 0, 1, 1], [], []>} : vector<8x128xbf16>, vector<128x128xbf16>, vector<8x128xf32> -> vector<8x128xf32>
    %c0_9 = arith.constant 0 : index
    %c0_10 = arith.constant 0 : index
    %12 = vector.load %arg5[%c0_9, %c0_10] : memref<1x128xf32, #tpu.memory_space<vmem>>, vector<1x128xf32>
    %13 = vector.broadcast %12 : vector<1x128xf32> to vector<8x128xf32>
    %14 = arith.addf %11, %13 : vector<8x128xf32>
    %cst_11 = arith.constant 0.000000e+00 : f32
    %15 = vector.broadcast %cst_11 : f32 to vector<8x128xf32>
    %16 = arith.maximumf %14, %15 : vector<8x128xf32>
    %17 = arith.truncf %16 : vector<8x128xf32> to vector<8x128xbf16>
    %c0_12 = arith.constant 0 : index
    %c0_13 = arith.constant 0 : index
    %18 = vector.load %arg6[%c0_12, %c0_13] : memref<128x128xbf16, #tpu.memory_space<vmem>>, vector<128x128xbf16>
    %cst_14 = arith.constant dense<0.000000e+00> : vector<8x128xf32>
    %19 = tpu.matmul %17, %18, %cst_14 {dimension_numbers = #tpu.dot_dimension_numbers<[1], [0], [0], [1], [0, 0, 1, 1], [], []>} : vector<8x128xbf16>, vector<128x128xbf16>, vector<8x128xf32> -> vector<8x128xf32>
    %c0_15 = arith.constant 0 : index
    %c0_16 = arith.constant 0 : index
    %20 = vector.load %arg7[%c0_15, %c0_16] : memref<1x128xf32, #tpu.memory_space<vmem>>, vector<1x128xf32>
    %21 = vector.broadcast %20 : vector<1x128xf32> to vector<8x128xf32>
    %22 = arith.addf %19, %21 : vector<8x128xf32>
    %cst_17 = arith.constant dense<0xFF800000> : vector<8xf32>
    %23 = vector.multi_reduction <maximumf>, %22, %cst_17 [1] : vector<8x128xf32> to vector<8xf32>
    %24 = vector.shape_cast %23 : vector<8xf32> to vector<8x1xf32>
    %25 = vector.broadcast %24 : vector<8x1xf32> to vector<8x128xf32>
    %26 = arith.subf %22, %25 : vector<8x128xf32>
    %27 = math.exp %26 : vector<8x128xf32>
    %cst_18 = arith.constant dense<0.000000e+00> : vector<8xf32>
    %28 = vector.multi_reduction <add>, %27, %cst_18 [1] : vector<8x128xf32> to vector<8xf32>
    %29 = vector.shape_cast %28 : vector<8xf32> to vector<8x1xf32>
    %30 = vector.broadcast %29 : vector<8x1xf32> to vector<8x128xf32>
    %31 = arith.divf %27, %30 : vector<8x128xf32>
    %32 = arith.truncf %31 : vector<8x128xf32> to vector<8x128xbf16>
    %c0_19 = arith.constant 0 : index
    %c0_20 = arith.constant 0 : index
    %33 = vector.load %arg8[%c0_19, %c0_20] : memref<8x128xbf16, #tpu.memory_space<vmem>>, vector<8x128xbf16>
    tpu.vector_store %arg8[%c0_19, %c0_20], %32 {strides = array<i32>} : memref<8x128xbf16, #tpu.memory_space<vmem>>, vector<8x128xbf16>,
    return
  }
  func.func @transform_0(%arg0: i32) -> (i32, i32) {
    %c0_i32 = arith.constant 0 : i32
    %c0_i32_0 = arith.constant 0 : i32
    return %arg0, %c0_i32 : i32, i32
  }
  func.func @transform_1(%arg0: i32) -> (i32, i32) {
    %c0_i32 = arith.constant 0 : i32
    %c0_i32_0 = arith.constant 0 : i32
    %c0_i32_1 = arith.constant 0 : i32
    return %c0_i32, %c0_i32_0 : i32, i32
  }
  func.func @transform_2(%arg0: i32) -> (i32, i32) {
    %c0_i32 = arith.constant 0 : i32
    %c0_i32_0 = arith.constant 0 : i32
    %c0_i32_1 = arith.constant 0 : i32
    return %c0_i32, %c0_i32_0 : i32, i32
  }
  func.func @transform_3(%arg0: i32) -> (i32, i32) {
    %c0_i32 = arith.constant 0 : i32
    %c0_i32_0 = arith.constant 0 : i32
    %c0_i32_1 = arith.constant 0 : i32
    return %c0_i32, %c0_i32_0 : i32, i32
  }
  func.func @transform_4(%arg0: i32) -> (i32, i32) {
    %c0_i32 = arith.constant 0 : i32
    %c0_i32_0 = arith.constant 0 : i32
    %c0_i32_1 = arith.constant 0 : i32
    return %c0_i32, %c0_i32_0 : i32, i32
  }
  func.func @transform_5(%arg0: i32) -> (i32, i32) {
    %c0_i32 = arith.constant 0 : i32
    %c0_i32_0 = arith.constant 0 : i32
    %c0_i32_1 = arith.constant 0 : i32
    return %c0_i32, %c0_i32_0 : i32, i32
  }
  func.func @transform_6(%arg0: i32) -> (i32, i32) {
    %c0_i32 = arith.constant 0 : i32
    %c0_i32_0 = arith.constant 0 : i32
    %c0_i32_1 = arith.constant 0 : i32
    return %c0_i32, %c0_i32_0 : i32, i32
  }
  func.func @transform_7(%arg0: i32) -> (i32, i32) {
    %c0_i32 = arith.constant 0 : i32
    %c0_i32_0 = arith.constant 0 : i32
    return %arg0, %c0_i32 : i32, i32
  }
}

</mosaic_0001>

<llo_original>
// kernel: _lambda_.1
$region0: #{_lambda_.1}
  #allocation0 [shape = 'u32[]', space=smem, size = 0x4, offset = 0x4, fixed_abs, tag = 'smem constant byte address 0x4 - core index']
  #allocation1 [shape = 'u32[144,128]{1,0:T(1,128)}', space=vmem, size = 0x12000, scoped, tag = 'internal scratch']
  %s0 = inlined_call_operand.vmem [shape: f32[8,128], index: 0, kind: input, shape index: {}]
  %s1 = inlined_call_operand.hbm [shape: bf16[128,128], index: 1, kind: input, shape index: {}]
  %s2 = inlined_call_operand.vmem [shape: f32[1,128], index: 2, kind: input, shape index: {}]
  %s3 = inlined_call_operand.hbm [shape: bf16[128,128], index: 3, kind: input, shape index: {}]
  %s4 = inlined_call_operand.vmem [shape: f32[1,128], index: 4, kind: input, shape index: {}]
  %s5 = inlined_call_operand.hbm [shape: bf16[128,128], index: 5, kind: input, shape index: {}]
  %s6 = inlined_call_operand.vmem [shape: f32[1,128], index: 6, kind: input, shape index: {}]
  %s7 = inlined_call_operand.vmem [shape: bf16[8,128], index: 7, kind: output, shape index: {}]
  %s8 = sld [smem:[#allocation0]]
  $region50: #{_lambda_.1} parent=0
    _
  %s10 = ssub.s32 1, %s8
  %s11 = scalar_select 0, %s10, %s8
  $region1: #{_lambda_.1} parent=0
    #allocation2 [shape = 'u8[32768]{0}', space=vmem, size = 0x8000, scoped, tag = 'input window, operand 1, single buffered']
    #allocation3 [shape = 's32[1]{0}', space=sflag, size = 0x4, scoped, tag = 'scoped memory for _lambda_.1']
    #allocation4 [shape = 'u8[32768]{0}', space=vmem, size = 0x8000, scoped, tag = 'input window, operand 3, single buffered']
    #allocation5 [shape = 's32[1]{0}', space=sflag, size = 0x4, scoped, tag = 'scoped memory for _lambda_.1']
    #allocation6 [shape = 'u8[32768]{0}', space=vmem, size = 0x8000, scoped, tag = 'input window, operand 5, single buffered']
    %12 = vsyncpa [#allocation3], 0
    %13 = vsyncpa [#allocation5], 0
    // Predicated region
    $region2: #{_lambda_.1} parent=1 // pred_check
      _
    $region3: #{_lambda_.1} parent=1 // pred_check_branch
      %15 = sbr.rel (0) target = $region5
    $region4: #{_lambda_.1} parent=1 // pred_region
      _
    $region5: #{_lambda_.1} parent=1 // pred_fallthru
      _
    // Predicated region
    $region6: #{_lambda_.1} parent=1 // pred_check
      _
    $region7: #{_lambda_.1} parent=1 // pred_check_branch
      %17 = sbr.rel (0) target = $region9
    $region8: #{_lambda_.1} parent=1 // pred_region
      %s19 = ssub.s32 1024, 1024
      %20 = vsyncadd [#allocation3], %s19
      %s21 = sshll.u32 [#allocation2], 4
      %s22 = int_to_ptr.vmem [resolvable:$true] %s21
      %27 = dma.hbm_to_vmem [thread:$0]  %s1, 1024, %s22, [#allocation3], 64, 64, 4
    $region9: #{_lambda_.1} parent=1 // pred_fallthru
      _
    // Predicated region
    $region10: #{_lambda_.1} parent=1 // pred_check
      _
    $region11: #{_lambda_.1} parent=1 // pred_check_branch
      %29 = sbr.rel (0) target = $region13
    $region12: #{_lambda_.1} parent=1 // pred_region
      _
    $region13: #{_lambda_.1} parent=1 // pred_fallthru
      _
    // Predicated region
    $region14: #{_lambda_.1} parent=1 // pred_check
      _
    $region15: #{_lambda_.1} parent=1 // pred_check_branch
      %31 = sbr.rel (0) target = $region17
    $region16: #{_lambda_.1} parent=1 // pred_region
      %s33 = ssub.s32 1024, 1024
      %34 = vsyncadd [#allocation5], %s33
      %s35 = sshll.u32 [#allocation4], 4
      %s36 = int_to_ptr.vmem [resolvable:$true] %s35
      %41 = dma.hbm_to_vmem [thread:$0]  %s3, 1024, %s36, [#allocation5], 64, 64, 4
    $region17: #{_lambda_.1} parent=1 // pred_fallthru
      _
    // Predicated region
    $region18: #{_lambda_.1} parent=1 // pred_check
      _
    $region19: #{_lambda_.1} parent=1 // pred_check_branch
      %43 = sbr.rel (0) target = $region21
    $region20: #{_lambda_.1} parent=1 // pred_region
      _
    $region21: #{_lambda_.1} parent=1 // pred_fallthru
      _
    // Predicated region
    $region22: #{_lambda_.1} parent=1 // pred_check
      _
    $region23: #{_lambda_.1} parent=1 // pred_check_branch
      %45 = sbr.rel (0) target = $region25
    $region24: #{_lambda_.1} parent=1 // pred_region
      %s47 = ssub.s32 1024, 1024
      %48 = vsyncadd [#allocation5], %s47
      %s49 = sshll.u32 [#allocation6], 4
      %s50 = int_to_ptr.vmem [resolvable:$true] %s49
      %55 = dma.hbm_to_vmem [thread:$0]  %s5, 1024, %s50, [#allocation5], 64, 64, 4
    $region25: #{_lambda_.1} parent=1 // pred_fallthru
      _
    // Predicated region
    $region26: #{_lambda_.1} parent=1 // pred_check
      _
    $region27: #{_lambda_.1} parent=1 // pred_check_branch
      %57 = sbr.rel (0) target = $region29
    $region28: #{_lambda_.1} parent=1 // pred_region
      _
    $region29: #{_lambda_.1} parent=1 // pred_fallthru
      _
    // Predicated region
    $region30: #{_lambda_.1} parent=1 // pred_check
      _
    $region31: #{_lambda_.1} parent=1 // pred_check_branch
      %59 = sbr.rel (0) target = $region33
    $region32: #{_lambda_.1} parent=1 // pred_region
      %60 = dma.done [#allocation3], 1024
    $region33: #{_lambda_.1} parent=1 // pred_fallthru
      _
    // Predicated region
    $region34: #{_lambda_.1} parent=1 // pred_check
      _
    $region35: #{_lambda_.1} parent=1 // pred_check_branch
      %62 = sbr.rel (0) target = $region37
    $region36: #{_lambda_.1} parent=1 // pred_region
      %63 = dma.done [#allocation5], 1024
    $region37: #{_lambda_.1} parent=1 // pred_fallthru
      _
    // Predicated region
    $region38: #{_lambda_.1} parent=1 // pred_check
      _
    $region39: #{_lambda_.1} parent=1 // pred_check_branch
      %65 = sbr.rel (0) target = $region41
    $region40: #{_lambda_.1} parent=1 // pred_region
      %66 = dma.done [#allocation5], 1024
    $region41: #{_lambda_.1} parent=1 // pred_fallthru
      _
    %v68 = vld [vmem:[%s0] sm:$0xff]
    %v69 = vpack.c.bf16 %v68, %v68
    %v70 = vld [vmem:[#allocation2] sm:$0xf]
    %v71 = vld [vmem:[#allocation2 + $0x4] sm:$0xf]
    %v72 = vld [vmem:[#allocation2 + $0x8] sm:$0xf]
    %v73 = vld [vmem:[#allocation2 + $0xc] sm:$0xf]
    %v74 = vld [vmem:[#allocation2 + $0x10] sm:$0xf]
    %v75 = vld [vmem:[#allocation2 + $0x14] sm:$0xf]
    %v76 = vld [vmem:[#allocation2 + $0x18] sm:$0xf]
    %v77 = vld [vmem:[#allocation2 + $0x1c] sm:$0xf]
    %v78 = vld [vmem:[#allocation2 + $0x20] sm:$0xf]
    %v79 = vld [vmem:[#allocation2 + $0x24] sm:$0xf]
    %v80 = vld [vmem:[#allocation2 + $0x28] sm:$0xf]
    %v81 = vld [vmem:[#allocation2 + $0x2c] sm:$0xf]
    %v82 = vld [vmem:[#allocation2 + $0x30] sm:$0xf]
    %v83 = vld [vmem:[#allocation2 + $0x34] sm:$0xf]
    %v84 = vld [vmem:[#allocation2 + $0x38] sm:$0xf]
    %v85 = vld [vmem:[#allocation2 + $0x3c] sm:$0xf]
    %v86 = vld [vmem:[%s2] sm:$0x1]
    %v88 = vlaneseq
    %v89 = vshrl.u32 %v88, 7
    %v90 = vsub.s32 0, %v89
    %v91 = vrot.slane %v86, %v90
    %v109 = vunpack.c.l.b16 %v70
    %v110 = vunpack.c.l.b16 %v71
    %v111 = vunpack.c.l.b16 %v72
    %v112 = vunpack.c.l.b16 %v73
    %v113 = vunpack.c.l.b16 %v74
    %v114 = vunpack.c.l.b16 %v75
    %v115 = vunpack.c.l.b16 %v76
    %v116 = vunpack.c.l.b16 %v77
    %v117 = vunpack.c.l.b16 %v78
    %v118 = vunpack.c.l.b16 %v79
    %v119 = vunpack.c.l.b16 %v80
    %v120 = vunpack.c.l.b16 %v81
    %v121 = vunpack.c.l.b16 %v82
    %v122 = vunpack.c.l.b16 %v83
    %v123 = vunpack.c.l.b16 %v84
    %v124 = vunpack.c.l.b16 %v85
    %v125 = vpack.c.b16 %v110, %v109
    %v126 = vpack.c.b16 %v112, %v111
    %v127 = vpack.c.b16 %v114, %v113
    %v128 = vpack.c.b16 %v116, %v115
    %v129 = vpack.c.b16 %v118, %v117
    %v130 = vpack.c.b16 %v120, %v119
    %v131 = vpack.c.b16 %v122, %v121
    %v132 = vpack.c.b16 %v124, %v123
    %141 = vmatprep.subr.bf16.mxu0 0
    %142 = vmatpush1.bf16.msra.mxu0 %v125
    %143 = vmatprep.subr.bf16.mxu0 0
    %144 = vmatpush1.bf16.msra.mxu0 %v126
    %145 = vmatprep.subr.bf16.mxu0 0
    %146 = vmatpush1.bf16.msra.mxu0 %v127
    %147 = vmatprep.subr.bf16.mxu0 0
    %148 = vmatpush1.bf16.msra.mxu0 %v128
    %149 = vmatprep.subr.bf16.mxu0 0
    %150 = vmatpush1.bf16.msra.mxu0 %v129
    %151 = vmatprep.subr.bf16.mxu0 0
    %152 = vmatpush1.bf16.msra.mxu0 %v130
    %153 = vmatprep.subr.bf16.mxu0 0
    %154 = vmatpush1.bf16.msra.mxu0 %v131
    %155 = vmatprep.subr.bf16.mxu0 0
    %156 = vmatpush1.bf16.msra.mxu0 %v132
    %157 = vmatprep.subr.bf16.mxu0 0
    %158 = vmatpush1.bf16.msra.mxu0 0
    %159 = vmatprep.subr.bf16.mxu0 0
    %160 = vmatpush1.bf16.msra.mxu0 0
    %161 = vmatprep.subr.bf16.mxu0 0
    %162 = vmatpush1.bf16.msra.mxu0 0
    %163 = vmatprep.subr.bf16.mxu0 0
    %164 = vmatpush1.bf16.msra.mxu0 0
    %165 = vmatprep.subr.bf16.mxu0 0
    %166 = vmatpush1.bf16.msra.mxu0 0
    %167 = vmatprep.subr.bf16.mxu0 0
    %168 = vmatpush1.bf16.msra.mxu0 0
    %169 = vmatprep.subr.bf16.mxu0 0
    %170 = vmatpush1.bf16.msra.mxu0 0
    %171 = vmatprep.subr.bf16.mxu0 0
    %172 = vmatpush1.bf16.msra.mxu0 0
    %173 = vmatprep.mubr.bf16.mxu0 0
    %174 = vmatmul.mubr.bf16.gmra.mrb[0].mxu0 %v69
    %v175 = vpop.f32.mrb[0].mxu0
    %v176 = vadd.f32 %v91, %v175
    %v177 = vpop.f32.mrb[0].mxu0
    %v178 = vpop.f32.mrb[0].mxu0
    %v179 = vpop.f32.mrb[0].mxu0
    %180 = vdwg.mxu0
    %v181 = vmax.f32 %v176, 0.0
    %v182 = vpack.c.bf16 %v181, %v181
    %v183 = vld [vmem:[#allocation4] sm:$0xf]
    %v184 = vld [vmem:[#allocation4 + $0x4] sm:$0xf]
    %v185 = vld [vmem:[#allocation4 + $0x8] sm:$0xf]
    %v186 = vld [vmem:[#allocation4 + $0xc] sm:$0xf]
    %v187 = vld [vmem:[#allocation4 + $0x10] sm:$0xf]
    %v188 = vld [vmem:[#allocation4 + $0x14] sm:$0xf]
    %v189 = vld [vmem:[#allocation4 + $0x18] sm:$0xf]
    %v190 = vld [vmem:[#allocation4 + $0x1c] sm:$0xf]
    %v191 = vld [vmem:[#allocation4 + $0x20] sm:$0xf]
    %v192 = vld [vmem:[#allocation4 + $0x24] sm:$0xf]
    %v193 = vld [vmem:[#allocation4 + $0x28] sm:$0xf]
    %v194 = vld [vmem:[#allocation4 + $0x2c] sm:$0xf]
    %v195 = vld [vmem:[#allocation4 + $0x30] sm:$0xf]
    %v196 = vld [vmem:[#allocation4 + $0x34] sm:$0xf]
    %v197 = vld [vmem:[#allocation4 + $0x38] sm:$0xf]
    %v198 = vld [vmem:[#allocation4 + $0x3c] sm:$0xf]
    %v199 = vld [vmem:[%s4] sm:$0x1]
    %v201 = vlaneseq
    %v202 = vshrl.u32 %v201, 7
    %v203 = vsub.s32 0, %v202
    %v204 = vrot.slane %v199, %v203
    %v222 = vunpack.c.l.b16 %v183
    %v223 = vunpack.c.l.b16 %v184
    %v224 = vunpack.c.l.b16 %v185
    %v225 = vunpack.c.l.b16 %v186
    %v226 = vunpack.c.l.b16 %v187
    %v227 = vunpack.c.l.b16 %v188
    %v228 = vunpack.c.l.b16 %v189
    %v229 = vunpack.c.l.b16 %v190
    %v230 = vunpack.c.l.b16 %v191
    %v231 = vunpack.c.l.b16 %v192
    %v232 = vunpack.c.l.b16 %v193
    %v233 = vunpack.c.l.b16 %v194
    %v234 = vunpack.c.l.b16 %v195
    %v235 = vunpack.c.l.b16 %v196
    %v236 = vunpack.c.l.b16 %v197
    %v237 = vunpack.c.l.b16 %v198
    %v238 = vpack.c.b16 %v223, %v222
    %v239 = vpack.c.b16 %v225, %v224
    %v240 = vpack.c.b16 %v227, %v226
    %v241 = vpack.c.b16 %v229, %v228
    %v242 = vpack.c.b16 %v231, %v230
    %v243 = vpack.c.b16 %v233, %v232
    %v244 = vpack.c.b16 %v235, %v234
    %v245 = vpack.c.b16 %v237, %v236
    %254 = vmatprep.subr.bf16.mxu0 0
    %255 = vmatpush1.bf16.msra.mxu0 %v238
    %256 = vmatprep.subr.bf16.mxu0 0
    %257 = vmatpush1.bf16.msra.mxu0 %v239
    %258 = vmatprep.subr.bf16.mxu0 0
    %259 = vmatpush1.bf16.msra.mxu0 %v240
    %260 = vmatprep.subr.bf16.mxu0 0
    %261 = vmatpush1.bf16.msra.mxu0 %v241
    %262 = vmatprep.subr.bf16.mxu0 0
    %263 = vmatpush1.bf16.msra.mxu0 %v242
    %264 = vmatprep.subr.bf16.mxu0 0
    %265 = vmatpush1.bf16.msra.mxu0 %v243
    %266 = vmatprep.subr.bf16.mxu0 0
    %267 = vmatpush1.bf16.msra.mxu0 %v244
    %268 = vmatprep.subr.bf16.mxu0 0
    %269 = vmatpush1.bf16.msra.mxu0 %v245
    %270 = vmatprep.subr.bf16.mxu0 0
    %271 = vmatpush1.bf16.msra.mxu0 0
    %272 = vmatprep.subr.bf16.mxu0 0
    %273 = vmatpush1.bf16.msra.mxu0 0
    %274 = vmatprep.subr.bf16.mxu0 0
    %275 = vmatpush1.bf16.msra.mxu0 0
    %276 = vmatprep.subr.bf16.mxu0 0
    %277 = vmatpush1.bf16.msra.mxu0 0
    %278 = vmatprep.subr.bf16.mxu0 0
    %279 = vmatpush1.bf16.msra.mxu0 0
    %280 = vmatprep.subr.bf16.mxu0 0
    %281 = vmatpush1.bf16.msra.mxu0 0
    %282 = vmatprep.subr.bf16.mxu0 0
    %283 = vmatpush1.bf16.msra.mxu0 0
    %284 = vmatprep.subr.bf16.mxu0 0
    %285 = vmatpush1.bf16.msra.mxu0 0
    %286 = vmatprep.mubr.bf16.mxu0 0
    %287 = vmatmul.mubr.bf16.gmra.mrb[0].mxu0 %v182
    %v288 = vpop.f32.mrb[0].mxu0
    %v289 = vadd.f32 %v204, %v288
    %v290 = vpop.f32.mrb[0].mxu0
    %v291 = vpop.f32.mrb[0].mxu0
    %v292 = vpop.f32.mrb[0].mxu0
    %293 = vdwg.mxu0
    %v294 = vmax.f32 %v289, 0.0
    %v295 = vpack.c.bf16 %v294, %v294
    %v296 = vld [vmem:[#allocation6] sm:$0xf]
    %v297 = vld [vmem:[#allocation6 + $0x4] sm:$0xf]
    %v298 = vld [vmem:[#allocation6 + $0x8] sm:$0xf]
    %v299 = vld [vmem:[#allocation6 + $0xc] sm:$0xf]
    %v300 = vld [vmem:[#allocation6 + $0x10] sm:$0xf]
    %v301 = vld [vmem:[#allocation6 + $0x14] sm:$0xf]
    %v302 = vld [vmem:[#allocation6 + $0x18] sm:$0xf]
    %v303 = vld [vmem:[#allocation6 + $0x1c] sm:$0xf]
    %v304 = vld [vmem:[#allocation6 + $0x20] sm:$0xf]
    %v305 = vld [vmem:[#allocation6 + $0x24] sm:$0xf]
    %v306 = vld [vmem:[#allocation6 + $0x28] sm:$0xf]
    %v307 = vld [vmem:[#allocation6 + $0x2c] sm:$0xf]
    %v308 = vld [vmem:[#allocation6 + $0x30] sm:$0xf]
    %v309 = vld [vmem:[#allocation6 + $0x34] sm:$0xf]
    %v310 = vld [vmem:[#allocation6 + $0x38] sm:$0xf]
    %v311 = vld [vmem:[#allocation6 + $0x3c] sm:$0xf]
    %v312 = vld [vmem:[%s6] sm:$0x1]
    %v314 = vlaneseq
    %v315 = vshrl.u32 %v314, 7
    %v316 = vsub.s32 0, %v315
    %v317 = vrot.slane %v312, %v316
    %v335 = vunpack.c.l.b16 %v296
    %v336 = vunpack.c.l.b16 %v297
    %v337 = vunpack.c.l.b16 %v298
    %v338 = vunpack.c.l.b16 %v299
    %v339 = vunpack.c.l.b16 %v300
    %v340 = vunpack.c.l.b16 %v301
    %v341 = vunpack.c.l.b16 %v302
    %v342 = vunpack.c.l.b16 %v303
    %v343 = vunpack.c.l.b16 %v304
    %v344 = vunpack.c.l.b16 %v305
    %v345 = vunpack.c.l.b16 %v306
    %v346 = vunpack.c.l.b16 %v307
    %v347 = vunpack.c.l.b16 %v308
    %v348 = vunpack.c.l.b16 %v309
    %v349 = vunpack.c.l.b16 %v310
    %v350 = vunpack.c.l.b16 %v311
    %v351 = vpack.c.b16 %v336, %v335
    %v352 = vpack.c.b16 %v338, %v337
    %v353 = vpack.c.b16 %v340, %v339
    %v354 = vpack.c.b16 %v342, %v341
    %v355 = vpack.c.b16 %v344, %v343
    %v356 = vpack.c.b16 %v346, %v345
    %v357 = vpack.c.b16 %v348, %v347
    %v358 = vpack.c.b16 %v350, %v349
    %367 = vmatprep.subr.bf16.mxu0 0
    %368 = vmatpush1.bf16.msra.mxu0 %v351
    %369 = vmatprep.subr.bf16.mxu0 0
    %370 = vmatpush1.bf16.msra.mxu0 %v352
    %371 = vmatprep.subr.bf16.mxu0 0
    %372 = vmatpush1.bf16.msra.mxu0 %v353
    %373 = vmatprep.subr.bf16.mxu0 0
    %374 = vmatpush1.bf16.msra.mxu0 %v354
    %375 = vmatprep.subr.bf16.mxu0 0
    %376 = vmatpush1.bf16.msra.mxu0 %v355
    %377 = vmatprep.subr.bf16.mxu0 0
    %378 = vmatpush1.bf16.msra.mxu0 %v356
    %379 = vmatprep.subr.bf16.mxu0 0
    %380 = vmatpush1.bf16.msra.mxu0 %v357
    %381 = vmatprep.subr.bf16.mxu0 0
    %382 = vmatpush1.bf16.msra.mxu0 %v358
    %383 = vmatprep.subr.bf16.mxu0 0
    %384 = vmatpush1.bf16.msra.mxu0 0
    %385 = vmatprep.subr.bf16.mxu0 0
    %386 = vmatpush1.bf16.msra.mxu0 0
    %387 = vmatprep.subr.bf16.mxu0 0
    %388 = vmatpush1.bf16.msra.mxu0 0
    %389 = vmatprep.subr.bf16.mxu0 0
    %390 = vmatpush1.bf16.msra.mxu0 0
    %391 = vmatprep.subr.bf16.mxu0 0
    %392 = vmatpush1.bf16.msra.mxu0 0
    %393 = vmatprep.subr.bf16.mxu0 0
    %394 = vmatpush1.bf16.msra.mxu0 0
    %395 = vmatprep.subr.bf16.mxu0 0
    %396 = vmatpush1.bf16.msra.mxu0 0
    %397 = vmatprep.subr.bf16.mxu0 0
    %398 = vmatpush1.bf16.msra.mxu0 0
    %399 = vmatprep.mubr.bf16.mxu0 0
    %400 = vmatmul.mubr.bf16.gmra.mrb[0].mxu0 %v295
    %v401 = vpop.f32.mrb[0].mxu0
    %v402 = vadd.f32 %v317, %v401
    %v403 = vpop.f32.mrb[0].mxu0
    %v404 = vpop.f32.mrb[0].mxu0
    %v405 = vpop.f32.mrb[0].mxu0
    %406 = vdwg.mxu0
    %407 = vmax.xlane.f32.xlu0 %v402
    %v408 = vpop.xlane.xlu0 %407
    %v409 = vsub.f32 %v402, %v408
    %v410 = vmul.f32 %v409, 1.442695
    %v411 = vpow.pop %v410
    %412 = vadd.xlane.f32.xlu0 %v411
    %v413 = vpop.xlane.xlu0 %412
    %v414 = vrcp.pop %v413
    %v415 = vmul.f32 %v411, %v414
    %v416 = vpack.c.bf16 %v415, %v415
    %417 = vst [vmem:[%s7] sm:$0xf] %v416
    // Predicated region
    $region42: #{_lambda_.1} parent=1 // pred_check
      _
    $region43: #{_lambda_.1} parent=1 // pred_check_branch
      %419 = sbr.rel (0) target = $region45
    $region44: #{_lambda_.1} parent=1 // pred_region
      _
    $region45: #{_lambda_.1} parent=1 // pred_fallthru
      _
    // Predicated region
    $region46: #{_lambda_.1} parent=1 // pred_check
      _
    $region47: #{_lambda_.1} parent=1 // pred_check_branch
      %421 = sbr.rel (0) target = $region49
    $region48: #{_lambda_.1} parent=1 // pred_region
      _
    $region49: #{_lambda_.1} parent=1 // pred_fallthru
      _
    %422 = vsyncpa [#allocation3], 1
    %423 = vsyncpa [#allocation5], 1

</llo_original>
